<compile_context>
chip_gen: v7x
topology: tpu7x:2x2x1
jax: 0.10.0
libtpu: 0.0.40
codegen_flags: <defaults>
</compile_context>

<pallas_src>
import functools

import jax
import jax.numpy as jnp
from jax.experimental import pallas as pl
from jax.experimental.pallas import tpu as pltpu


def _infonce_kernel(anchor_ref, positive_ref, negatives_ref, out_ref,
                    m_ref, s_ref, *, inv_temp, inv_b):
    k = pl.program_id(1)
    nk = pl.num_programs(1)

    @pl.when(k == 0)
    def _init():
        m_ref[...] = jnp.full_like(m_ref, -jnp.inf)
        s_ref[...] = jnp.zeros_like(s_ref)

    a = anchor_ref[...]                        # (TB, D) native dtype -> MXU
    n = negatives_ref[...]                     # (TN, D) native dtype -> MXU
    # scores[i, t] = <a_i, n_t> / T  (contract over D, flash-attn style Q.K^T)
    scores = jax.lax.dot_general(
        a, n, (((1,), (1,)), ((), ())),
        preferred_element_type=jnp.float32) * inv_temp          # (TB, TN) f32

    # Online (numerically stable) logsumexp over the streamed negatives axis.
    m_prev = m_ref[...]                                          # (TB, 1)
    m_new = jnp.maximum(m_prev, jnp.max(scores, axis=1, keepdims=True))
    alpha = jnp.exp(m_prev - m_new)                              # 0 on first tile
    s_ref[...] = s_ref[...] * alpha + jnp.sum(
        jnp.exp(scores - m_new), axis=1, keepdims=True)
    m_ref[...] = m_new

    @pl.when(k == nk - 1)
    def _finalize():
        lse = m_ref[...] + jnp.log(s_ref[...])                   # (TB, 1)
        # positive-score term: (1/(B*T)) * <a_i, sum_j p_j>  per anchor row.
        p_sum = jnp.sum(positive_ref[...].astype(jnp.float32), axis=0,
                        keepdims=True)                           # (1, D)
        pos_row = jnp.sum(a.astype(jnp.float32) * p_sum, axis=1,
                          keepdims=True) * (inv_temp * inv_b)    # (TB, 1)
        out_ref[...] = lse - pos_row


def _pick_tile(total, candidates):
    for c in candidates:
        if total % c == 0:
            return c
    return total  # fall back to the full extent (always legal for BlockSpec)


def infonce_loss(anchor, positive, negatives, temperature=1.0):
    B, D = anchor.shape
    N, _ = negatives.shape
    TB = _pick_tile(B, (256, 128))       # MXU-aligned anchor tile where possible
    TN = _pick_tile(N, (512, 256, 128))  # streamed negatives tile
    nb, nk = B // TB, N // TN

    kernel = functools.partial(
        _infonce_kernel,
        inv_temp=1.0 / float(temperature),
        inv_b=1.0 / float(B))

    per_row = pl.pallas_call(
        kernel,
        out_shape=jax.ShapeDtypeStruct((B, 1), jnp.float32),
        grid=(nb, nk),
        in_specs=[
            pl.BlockSpec((TB, D), lambda b, k: (b, 0)),   # anchor tile, resident over k
            pl.BlockSpec((B, D), lambda b, k: (0, 0)),    # positives, fetched once
            pl.BlockSpec((TN, D), lambda b, k: (k, 0)),   # negatives streamed over k
        ],
        out_specs=pl.BlockSpec((TB, 1), lambda b, k: (b, 0)),
        scratch_shapes=[
            pltpu.VMEM((TB, 1), jnp.float32),   # running max m_i
            pltpu.VMEM((TB, 1), jnp.float32),   # running sum of exp(score - m_i)
        ],
        compiler_params=pltpu.CompilerParams(
            dimension_semantics=("parallel", "arbitrary")),
    )(anchor, positive, negatives)

    # Trivial final combine: mean of the B per-row partials (B scalars).
    return jnp.mean(per_row)


def infonce_loss_ref(anchor, positive, negatives, temperature=1.0):
    pos = (anchor @ positive.T) / temperature
    neg = (anchor @ negatives.T) / temperature
    loss = -jnp.log(jnp.exp(pos) / jnp.sum(jnp.exp(neg), axis=1)[None, :])
    return jnp.mean(loss)


if __name__ == "__main__":
    B, D, N = 8, 32, 16          # batch, feature dim, number of negatives
    temperature = 0.5

    key = jax.random.PRNGKey(0)
    k_a, k_p, k_n = jax.random.split(key, 3)
    anchor = jax.random.normal(k_a, (B, D), dtype=jnp.float32)
    positive = jax.random.normal(k_p, (B, D), dtype=jnp.float32)
    negatives = jax.random.normal(k_n, (N, D), dtype=jnp.float32)

    out = jax.block_until_ready(infonce_loss(anchor, positive, negatives, temperature))
    ref = jax.block_until_ready(infonce_loss_ref(anchor, positive, negatives, temperature))

    assert jnp.isfinite(out), "kernel produced non-finite loss"
    assert jnp.allclose(out, ref, rtol=1e-5, atol=1e-4), (out, ref)
    print("KERNEL_OK")
</pallas_src>

<mosaic_0001>
module attributes {stable_mosaic.version = 11 : i64} {
  func.func @_infonce_kernel(%arg0: i32, %arg1: i32, %arg2: memref<8x32xf32, #tpu.memory_space<vmem>>, %arg3: memref<8x32xf32, #tpu.memory_space<vmem>>, %arg4: memref<16x32xf32, #tpu.memory_space<vmem>>, %arg5: memref<8x1xf32, #tpu.memory_space<vmem>>, %arg6: memref<8x1xf32, #tpu.memory_space<vmem>>, %arg7: memref<8x1xf32, #tpu.memory_space<vmem>>) attributes {dimension_semantics = [#tpu.dimension_semantics<parallel>, #tpu.dimension_semantics<arbitrary>], iteration_bounds = array<i64: 1, 1>, scalar_prefetch = 0 : i64, scratch_operands = 2 : i64, tpu.core_type = #tpu.core_type<tc>, window_params = [{transform_indices = @transform_0, window_bounds = array<i64: 8, 32>}, {pipeline_mode = #tpu.pipeline_mode<synchronous>, transform_indices = @transform_1, window_bounds = array<i64: 8, 32>}, {transform_indices = @transform_2, window_bounds = array<i64: 16, 32>}, {transform_indices = @transform_3, window_bounds = array<i64: 8, 1>}]} {
    %c0_i32 = arith.constant 0 : i32
    %0 = arith.cmpi eq, %arg1, %c0_i32 : i32
    %1 = arith.extui %0 : i1 to i32
    %c0_i32_0 = arith.constant 0 : i32
    %2 = arith.cmpi ne, %1, %c0_i32_0 : i32
    scf.if %2 {
      %cst_17 = arith.constant 0xFF800000 : f32
      %27 = vector.broadcast %cst_17 : f32 to vector<8x1xf32>
      %c0_18 = arith.constant 0 : index
      %c0_19 = arith.constant 0 : index
      %28 = vector.load %arg6[%c0_18, %c0_19] : memref<8x1xf32, #tpu.memory_space<vmem>>, vector<8x1xf32>
      tpu.vector_store %arg6[%c0_18, %c0_19], %27 {strides = array<i32>} : memref<8x1xf32, #tpu.memory_space<vmem>>, vector<8x1xf32>,
      %cst_20 = arith.constant 0.000000e+00 : f32
      %29 = vector.broadcast %cst_20 : f32 to vector<8x1xf32>
      %c0_21 = arith.constant 0 : index
      %c0_22 = arith.constant 0 : index
      %30 = vector.load %arg7[%c0_21, %c0_22] : memref<8x1xf32, #tpu.memory_space<vmem>>, vector<8x1xf32>
      tpu.vector_store %arg7[%c0_21, %c0_22], %29 {strides = array<i32>} : memref<8x1xf32, #tpu.memory_space<vmem>>, vector<8x1xf32>,
    } else {
    }
    %c0 = arith.constant 0 : index
    %c0_1 = arith.constant 0 : index
    %3 = vector.load %arg2[%c0, %c0_1] : memref<8x32xf32, #tpu.memory_space<vmem>>, vector<8x32xf32>
    %c0_2 = arith.constant 0 : index
    %c0_3 = arith.constant 0 : index
    %4 = vector.load %arg4[%c0_2, %c0_3] : memref<16x32xf32, #tpu.memory_space<vmem>>, vector<16x32xf32>
    %cst = arith.constant dense<0.000000e+00> : vector<8x16xf32>
    %5 = tpu.matmul %3, %4, %cst {dimension_numbers = #tpu.dot_dimension_numbers<[1], [1], [0], [0], [0, 0, 1, 0], [], []>} : vector<8x32xf32>, vector<16x32xf32>, vector<8x16xf32> -> vector<8x16xf32>
    %cst_4 = arith.constant 2.000000e+00 : f32
    %6 = vector.broadcast %cst_4 : f32 to vector<8x16xf32>
    %7 = arith.mulf %5, %6 : vector<8x16xf32>
    %c0_5 = arith.constant 0 : index
    %c0_6 = arith.constant 0 : index
    %8 = vector.load %arg6[%c0_5, %c0_6] : memref<8x1xf32, #tpu.memory_space<vmem>>, vector<8x1xf32>
    %cst_7 = arith.constant dense<0xFF800000> : vector<8xf32>
    %9 = vector.multi_reduction <maximumf>, %7, %cst_7 [1] : vector<8x16xf32> to vector<8xf32>
    %10 = vector.shape_cast %9 : vector<8xf32> to vector<8x1xf32>
    %11 = arith.maximumf %8, %10 : vector<8x1xf32>
    %12 = arith.subf %8, %11 : vector<8x1xf32>
    %13 = math.exp %12 : vector<8x1xf32>
    %c0_8 = arith.constant 0 : index
    %c0_9 = arith.constant 0 : index
    %14 = vector.load %arg7[%c0_8, %c0_9] : memref<8x1xf32, #tpu.memory_space<vmem>>, vector<8x1xf32>
    %15 = arith.mulf %14, %13 : vector<8x1xf32>
    %16 = vector.broadcast %11 : vector<8x1xf32> to vector<8x16xf32>
    %17 = arith.subf %7, %16 : vector<8x16xf32>
    %18 = math.exp %17 : vector<8x16xf32>
    %cst_10 = arith.constant dense<0.000000e+00> : vector<8xf32>
    %19 = vector.multi_reduction <add>, %18, %cst_10 [1] : vector<8x16xf32> to vector<8xf32>
    %20 = vector.shape_cast %19 : vector<8xf32> to vector<8x1xf32>
    %21 = arith.addf %15, %20 : vector<8x1xf32>
    %c0_11 = arith.constant 0 : index
    %c0_12 = arith.constant 0 : index
    %22 = vector.load %arg7[%c0_11, %c0_12] : memref<8x1xf32, #tpu.memory_space<vmem>>, vector<8x1xf32>
    tpu.vector_store %arg7[%c0_11, %c0_12], %21 {strides = array<i32>} : memref<8x1xf32, #tpu.memory_space<vmem>>, vector<8x1xf32>,
    %c0_13 = arith.constant 0 : index
    %c0_14 = arith.constant 0 : index
    %23 = vector.load %arg6[%c0_13, %c0_14] : memref<8x1xf32, #tpu.memory_space<vmem>>, vector<8x1xf32>
    tpu.vector_store %arg6[%c0_13, %c0_14], %11 {strides = array<i32>} : memref<8x1xf32, #tpu.memory_space<vmem>>, vector<8x1xf32>,
    %c0_i32_15 = arith.constant 0 : i32
    %24 = arith.cmpi eq, %arg1, %c0_i32_15 : i32
    %25 = arith.extui %24 : i1 to i32
    %c0_i32_16 = arith.constant 0 : i32
    %26 = arith.cmpi ne, %25, %c0_i32_16 : i32
    scf.if %26 {
      %c0_17 = arith.constant 0 : index
      %c0_18 = arith.constant 0 : index
      %27 = vector.load %arg6[%c0_17, %c0_18] : memref<8x1xf32, #tpu.memory_space<vmem>>, vector<8x1xf32>
      %c0_19 = arith.constant 0 : index
      %c0_20 = arith.constant 0 : index
      %28 = vector.load %arg7[%c0_19, %c0_20] : memref<8x1xf32, #tpu.memory_space<vmem>>, vector<8x1xf32>
      %29 = math.log %28 : vector<8x1xf32>
      %30 = arith.addf %27, %29 : vector<8x1xf32>
      %c0_21 = arith.constant 0 : index
      %c0_22 = arith.constant 0 : index
      %31 = vector.load %arg3[%c0_21, %c0_22] : memref<8x32xf32, #tpu.memory_space<vmem>>, vector<8x32xf32>
      %cst_23 = arith.constant dense<0.000000e+00> : vector<32xf32>
      %32 = vector.multi_reduction <add>, %31, %cst_23 [0] : vector<8x32xf32> to vector<32xf32>
      %33 = vector.shape_cast %32 : vector<32xf32> to vector<1x32xf32>
      %34 = vector.broadcast %33 : vector<1x32xf32> to vector<8x32xf32>
      %35 = arith.mulf %3, %34 : vector<8x32xf32>
      %cst_24 = arith.constant dense<0.000000e+00> : vector<8xf32>
      %36 = vector.multi_reduction <add>, %35, %cst_24 [1] : vector<8x32xf32> to vector<8xf32>
      %37 = vector.shape_cast %36 : vector<8xf32> to vector<8x1xf32>
      %cst_25 = arith.constant 2.500000e-01 : f32
      %38 = vector.broadcast %cst_25 : f32 to vector<8x1xf32>
      %39 = arith.mulf %37, %38 : vector<8x1xf32>
      %40 = arith.subf %30, %39 : vector<8x1xf32>
      %c0_26 = arith.constant 0 : index
      %c0_27 = arith.constant 0 : index
      %41 = vector.load %arg5[%c0_26, %c0_27] : memref<8x1xf32, #tpu.memory_space<vmem>>, vector<8x1xf32>
      tpu.vector_store %arg5[%c0_26, %c0_27], %40 {strides = array<i32>} : memref<8x1xf32, #tpu.memory_space<vmem>>, vector<8x1xf32>,
    } else {
    }
    return
  }
  func.func @transform_0(%arg0: i32, %arg1: i32) -> (i32, i32) {
    %c0_i32 = arith.constant 0 : i32
    %c0_i32_0 = arith.constant 0 : i32
    return %arg0, %c0_i32 : i32, i32
  }
  func.func @transform_1(%arg0: i32, %arg1: i32) -> (i32, i32) {
    %c0_i32 = arith.constant 0 : i32
    %c0_i32_0 = arith.constant 0 : i32
    %c0_i32_1 = arith.constant 0 : i32
    return %c0_i32, %c0_i32_0 : i32, i32
  }
  func.func @transform_2(%arg0: i32, %arg1: i32) -> (i32, i32) {
    %c0_i32 = arith.constant 0 : i32
    %c0_i32_0 = arith.constant 0 : i32
    return %arg1, %c0_i32 : i32, i32
  }
  func.func @transform_3(%arg0: i32, %arg1: i32) -> (i32, i32) {
    %c0_i32 = arith.constant 0 : i32
    %c0_i32_0 = arith.constant 0 : i32
    return %arg0, %c0_i32 : i32, i32
  }
}

</mosaic_0001>

<llo_original>
// kernel: tpu_custom_call.1
$region0: #{tpu_custom_call.1}
  #allocation0 [shape = 'u32[]', space=smem, size = 0x4, offset = 0x4, fixed_abs, tag = 'smem constant byte address 0x4 - core index']
  #allocation1 [shape = 'u32[144,128]{1,0:T(1,128)}', space=vmem, size = 0x12000, scoped, tag = 'internal scratch']
  #allocation2 [shape = 'f32[8,1]{1,0:T(8,128)}', space=vmem, size = 0x1000, scoped, tag = 'scratch operand']
  #allocation3 [shape = 'f32[8,1]{1,0:T(8,128)}', space=vmem, size = 0x1000, scoped, tag = 'scratch operand']
  %s0 = inlined_call_operand.hbm [shape: f32[8,32], index: 0, kind: input, shape index: {}]
  %s1 = inlined_call_operand.hbm [shape: f32[8,32], index: 1, kind: input, shape index: {}]
  %s2 = inlined_call_operand.hbm [shape: f32[16,32], index: 2, kind: input, shape index: {}]
  %s3 = inlined_call_operand.vmem [shape: f32[8,1], index: 3, kind: output, shape index: {}]
  %s4 = sld [smem:[#allocation0]]
  $region42: #{tpu_custom_call.1} parent=0
    _
  %s6 = ssub.s32 1, %s4
  %s7 = scalar_select 0, %s6, %s4
  $region1: #{tpu_custom_call.1} parent=0
    #allocation4 [shape = 'u8[4096]{0}', space=vmem, size = 0x1000, scoped, tag = 'input window, operand 0, single buffered']
    #allocation5 [shape = 's32[1]{0}', space=sflag, size = 0x4, scoped, tag = 'scoped memory for tpu_custom_call.1']
    #allocation6 [shape = 'u8[4096]{0}', space=vmem, size = 0x1000, scoped, tag = 'input window, operand 1, single buffered']
    #allocation7 [shape = 's32[1]{0}', space=sflag, size = 0x4, scoped, tag = 'scoped memory for tpu_custom_call.1']
    #allocation8 [shape = 'u8[8192]{0}', space=vmem, size = 0x2000, scoped, tag = 'input window, operand 2, single buffered']
    %8 = vsyncpa [#allocation5], 0
    %9 = vsyncpa [#allocation7], 0
    // Predicated region
    $region2: #{tpu_custom_call.1} parent=1 // pred_check
      _
    $region3: #{tpu_custom_call.1} parent=1 // pred_check_branch
      %11 = sbr.rel (0) target = $region5
    $region4: #{tpu_custom_call.1} parent=1 // pred_region
      %s13 = ssub.s32 128, 128
      %14 = vsyncadd [#allocation5], %s13
      %s16 = sshll.u32 [#allocation4], 4
      %s17 = int_to_ptr.vmem [resolvable:$true] %s16
      %19 = dma.hbm_to_vmem [thread:$0]  %s0, 128, %s17, [#allocation5]
    $region5: #{tpu_custom_call.1} parent=1 // pred_fallthru
      _
    // Predicated region
    $region6: #{tpu_custom_call.1} parent=1 // pred_check
      _
    $region7: #{tpu_custom_call.1} parent=1 // pred_check_branch
      %21 = sbr.rel (0) target = $region9
    $region8: #{tpu_custom_call.1} parent=1 // pred_region
      %s23 = ssub.s32 128, 128
      %24 = vsyncadd [#allocation7], %s23
      %s26 = sshll.u32 [#allocation6], 4
      %s27 = int_to_ptr.vmem [resolvable:$true] %s26
      %29 = dma.hbm_to_vmem [thread:$0]  %s1, 128, %s27, [#allocation7]
    $region9: #{tpu_custom_call.1} parent=1 // pred_fallthru
      _
    // Predicated region
    $region10: #{tpu_custom_call.1} parent=1 // pred_check
      _
    $region11: #{tpu_custom_call.1} parent=1 // pred_check_branch
      %31 = sbr.rel (0) target = $region13
    $region12: #{tpu_custom_call.1} parent=1 // pred_region
      %s33 = ssub.s32 256, 256
      %34 = vsyncadd [#allocation7], %s33
      %s35 = sshll.u32 [#allocation8], 4
      %s36 = int_to_ptr.vmem [resolvable:$true] %s35
      %41 = dma.hbm_to_vmem [thread:$0]  %s2, 256, %s36, [#allocation7], 128, 128, 8
    $region13: #{tpu_custom_call.1} parent=1 // pred_fallthru
      _
    // Predicated region
    $region14: #{tpu_custom_call.1} parent=1 // pred_check
      _
    $region15: #{tpu_custom_call.1} parent=1 // pred_check_branch
      %43 = sbr.rel (0) target = $region17
    $region16: #{tpu_custom_call.1} parent=1 // pred_region
      %44 = dma.done [#allocation5], 128
    $region17: #{tpu_custom_call.1} parent=1 // pred_fallthru
      _
    // Predicated region
    $region18: #{tpu_custom_call.1} parent=1 // pred_check
      _
    $region19: #{tpu_custom_call.1} parent=1 // pred_check_branch
      %46 = sbr.rel (0) target = $region21
    $region20: #{tpu_custom_call.1} parent=1 // pred_region
      %47 = dma.done [#allocation7], 128
    $region21: #{tpu_custom_call.1} parent=1 // pred_fallthru
      _
    // Predicated region
    $region22: #{tpu_custom_call.1} parent=1 // pred_check
      _
    $region23: #{tpu_custom_call.1} parent=1 // pred_check_branch
      %49 = sbr.rel (0) target = $region25
    $region24: #{tpu_custom_call.1} parent=1 // pred_region
      %50 = dma.done [#allocation7], 256
    $region25: #{tpu_custom_call.1} parent=1 // pred_fallthru
      _
    %p51 = scmp.eq.s32.totalorder 0, 0
    // Predicated region
    $region26: #{tpu_custom_call.1} parent=1 // pred_check
      %p52 = pneg %p51
    $region27: #{tpu_custom_call.1} parent=1 // pred_check_branch
      %54 = sbr.rel (%p52) target = $region29
    $region28: #{tpu_custom_call.1} parent=1 // pred_region
      %vm55 = vcmask 7168
      %56 = vst.msk [vmem:[#allocation2] sm:$0xff] %vm55, -inf
      %57 = vst.msk [vmem:[#allocation3] sm:$0xff] %vm55, 0.0
    $region29: #{tpu_custom_call.1} parent=1 // pred_fallthru
      _
    %v58 = vld [vmem:[#allocation4] sm:$0xff]
    %v59 = vld [vmem:[#allocation8] sm:$0xff]
    %v60 = vld [vmem:[#allocation8 + $0x8] sm:$0xff]
    %vm61 = vcmask 261120
    %v63 = vsel %vm61, %v58, 0
    %v66 = vsel %vm61, %v59, 0
    %v69 = vsel %vm61, %v60, 0
    %71 = vmatprep.subr.mxu0 0.0
    %72 = vmatpush1.xpose.msra.mxu0 %v66
    %73 = vmatprep.subr.mxu0 0.0
    %74 = vmatpush1.xpose.msra.mxu0 %v69
    %75 = vmatprep.subr.mxu0 0.0
    %76 = vmatpush1.xpose.msra.mxu0 0.0
    %77 = vmatprep.subr.mxu0 0.0
    %78 = vmatpush1.xpose.msra.mxu0 0.0
    %79 = vmatprep.subr.mxu0 0.0
    %80 = vmatpush1.xpose.msra.mxu0 0.0
    %81 = vmatprep.subr.mxu0 0.0
    %82 = vmatpush1.xpose.msra.mxu0 0.0
    %83 = vmatprep.subr.mxu0 0.0
    %84 = vmatpush1.xpose.msra.mxu0 0.0
    %85 = vmatprep.subr.mxu0 0.0
    %86 = vmatpush1.xpose.msra.mxu0 0.0
    %87 = vmatprep.subr.mxu0 0.0
    %88 = vmatpush1.xpose.msra.mxu0 0.0
    %89 = vmatprep.subr.mxu0 0.0
    %90 = vmatpush1.xpose.msra.mxu0 0.0
    %91 = vmatprep.subr.mxu0 0.0
    %92 = vmatpush1.xpose.msra.mxu0 0.0
    %93 = vmatprep.subr.mxu0 0.0
    %94 = vmatpush1.xpose.msra.mxu0 0.0
    %95 = vmatprep.subr.mxu0 0.0
    %96 = vmatpush1.xpose.msra.mxu0 0.0
    %97 = vmatprep.subr.mxu0 0.0
    %98 = vmatpush1.xpose.msra.mxu0 0.0
    %99 = vmatprep.subr.mxu0 0.0
    %100 = vmatpush1.xpose.msra.mxu0 0.0
    %101 = vmatprep.subr.mxu0 0.0
    %102 = vmatpush1.xpose.msra.mxu0 0.0
    %103 = vmatprep.subr.mxu0 0.0
    %104 = vmatpush1.xpose.msra.mxu0 0.0
    %105 = vmatprep.subr.mxu0 0.0
    %106 = vmatpush1.xpose.msra.mxu0 0.0
    %107 = vmatprep.subr.mxu0 0.0
    %108 = vmatpush1.xpose.msra.mxu0 0.0
    %109 = vmatprep.subr.mxu0 0.0
    %110 = vmatpush1.xpose.msra.mxu0 0.0
    %111 = vmatprep.subr.mxu0 0.0
    %112 = vmatpush1.xpose.msra.mxu0 0.0
    %113 = vmatprep.subr.mxu0 0.0
    %114 = vmatpush1.xpose.msra.mxu0 0.0
    %115 = vmatprep.subr.mxu0 0.0
    %116 = vmatpush1.xpose.msra.mxu0 0.0
    %117 = vmatprep.subr.mxu0 0.0
    %118 = vmatpush1.xpose.msra.mxu0 0.0
    %119 = vmatprep.subr.mxu0 0.0
    %120 = vmatpush1.xpose.msra.mxu0 0.0
    %121 = vmatprep.subr.mxu0 0.0
    %122 = vmatpush1.xpose.msra.mxu0 0.0
    %123 = vmatprep.subr.mxu0 0.0
    %124 = vmatpush1.xpose.msra.mxu0 0.0
    %125 = vmatprep.subr.mxu0 0.0
    %126 = vmatpush1.xpose.msra.mxu0 0.0
    %127 = vmatprep.subr.mxu0 0.0
    %128 = vmatpush1.xpose.msra.mxu0 0.0
    %129 = vmatprep.subr.mxu0 0.0
    %130 = vmatpush1.xpose.msra.mxu0 0.0
    %131 = vmatprep.subr.mxu0 0.0
    %132 = vmatpush1.xpose.msra.mxu0 0.0
    %133 = vmatprep.subr.mxu0 0.0
    %134 = vmatpush1.xpose.msra.mxu0 0.0
    %135 = vmatprep.mubr.f32.mxu0 0.0
    %136 = vmatmul.mubr.f32.gmra.mrb[0].mxu0 %v63
    %v137 = vpop.f32.mrb[0].mxu0
    %v138 = vadd.f32 0.0, %v137
    %v139 = vpop.f32.mrb[0].mxu0
    %140 = vdwg.mxu0
    %v141 = vmul.f32 %v138, 2.0
    %v142 = vld [vmem:[#allocation2] sm:$0xff]
    %vm143 = vcmask 130048
    %v144 = vsel %vm143, %v141, -inf
    %145 = vmax.xlane.f32.xlu0 %v144
    %v146 = vpop.xlane.xlu0 %145
    %v147 = vmax.f32 %v142, %v146
    %v148 = vsub.f32 %v142, %v147
    %v149 = vmul.f32 %v148, 1.442695
    %v150 = vpow.pop %v149
    %v151 = vld [vmem:[#allocation3] sm:$0xff]
    %v152 = vmul.f32 %v151, %v150
    %154 = vset.pattern.permute.xlu0 0
    %155 = vperm.xlu0 %154, %v147
    %v156 = vpop.permute.xlu0 %155
    %v158 = vsub.f32 %v141, %v156
    %v159 = vmul.f32 %v158, 1.442695
    %v160 = vpow.pop %v159
    %v161 = vsel %vm143, %v160, 0.0
    %162 = vadd.xlane.f32.xlu0 %v161
    %v163 = vpop.xlane.xlu0 %162
    %v164 = vadd.f32 %v152, %v163
    %vm165 = vcmask 7168
    %166 = vst.msk [vmem:[#allocation3] sm:$0xff] %vm165, %v164
    %167 = vst.msk [vmem:[#allocation2] sm:$0xff] %vm165, %v147
    // Predicated region
    $region30: #{tpu_custom_call.1} parent=1 // pred_check
      %p168 = pneg %p51
    $region31: #{tpu_custom_call.1} parent=1 // pred_check_branch
      %170 = sbr.rel (%p168) target = $region33
    $region32: #{tpu_custom_call.1} parent=1 // pred_region
      %v171 = vld [vmem:[#allocation2] sm:$0xff]
      %v172 = vld [vmem:[#allocation3] sm:$0xff]
      %v173 = vlog2.pop %v172
      %v174 = vmul.f32 %v173, 0.6931472
      %v175 = vadd.f32 %v171, %v174
      %v176 = vld [vmem:[#allocation6] sm:$0xff]
      %v177 = vsel %vm61, %v176, 0.0
      %v178 = vrot.slane %v177, 4
      %v179 = vadd.f32 %v177, %v178
      %v180 = vrot.slane %v179, 2
      %v181 = vadd.f32 %v179, %v180
      %v182 = vrot.slane %v181, 1
      %v183 = vadd.f32 %v181, %v182
      %v184 = vmul.f32 %v58, %v183
      %v185 = vsel %vm61, %v184, 0.0
      %186 = vadd.xlane.f32.xlu0 %v185
      %v187 = vpop.xlane.xlu0 %186
      %v188 = vmul.f32 %v187, 0.25
      %v189 = vsub.f32 %v175, %v188
      %190 = vst.msk [vmem:[%s3] sm:$0xff] %vm165, %v189
    $region33: #{tpu_custom_call.1} parent=1 // pred_fallthru
      _
    // Predicated region
    $region34: #{tpu_custom_call.1} parent=1 // pred_check
      _
    $region35: #{tpu_custom_call.1} parent=1 // pred_check_branch
      %192 = sbr.rel (0) target = $region37
    $region36: #{tpu_custom_call.1} parent=1 // pred_region
      _
    $region37: #{tpu_custom_call.1} parent=1 // pred_fallthru
      _
    // Predicated region
    $region38: #{tpu_custom_call.1} parent=1 // pred_check
      _
    $region39: #{tpu_custom_call.1} parent=1 // pred_check_branch
      %194 = sbr.rel (0) target = $region41
    $region40: #{tpu_custom_call.1} parent=1 // pred_region
      _
    $region41: #{tpu_custom_call.1} parent=1 // pred_fallthru
      _
    %195 = vsyncpa [#allocation5], 1
    %196 = vsyncpa [#allocation7], 1

</llo_original>
